<compile_context>
chip_gen: v5e
topology: v5e:2x2
jax: 0.10.0
libtpu: 0.0.40
codegen_flags: <defaults>
</compile_context>

<pallas_src>
import jax
import jax.numpy as jnp
from jax.experimental import pallas as pl
from jax.experimental.pallas import tpu as pltpu

_EPS = 1e-8


# ----------------------------------------------------------------------------
# Small-N path: single block, no grid, SMEM scalar output.
# ----------------------------------------------------------------------------
def _mi_loss_small_kernel(x_ref, y_ref, out_ref):
    eps = jnp.float32(_EPS)
    x = x_ref[...]                          # [N, D], native dtype -> MXU
    y = y_ref[...]
    xf = x.astype(jnp.float32)
    yf = y.astype(jnp.float32)

    # CosineSimilarity(dim=1)
    dot_xy = jnp.sum(xf * yf, axis=1, keepdims=True)              # [N, 1]
    nx2 = jnp.sum(xf * xf, axis=1, keepdims=True)
    ny2 = jnp.sum(yf * yf, axis=1, keepdims=True)
    pos_sim = dot_xy / jnp.maximum(jnp.sqrt(nx2) * jnp.sqrt(ny2), eps)

    # sim = x @ y.T without materializing y.T
    sim = jax.lax.dot_general(
        x, y, dimension_numbers=(((1,), (1,)), ((), ())),
        preferred_element_type=jnp.float32)                       # [N, N]

    # sum_j exp(sim * neg_mask): diag of sim is dot_xy; masked diag -> exp(0)=1
    denom = (jnp.sum(jnp.exp(sim), axis=1, keepdims=True)
             - jnp.exp(dot_xy) + 1.0 + eps)                       # [N, 1]

    # -log(exp(pos)/denom) == log(denom) - pos
    per_row = jnp.log(denom) - pos_sim
    out_ref[0, 0] = jnp.mean(per_row)


def _mi_loss_small(x, y):
    out = pl.pallas_call(
        _mi_loss_small_kernel,
        out_shape=jax.ShapeDtypeStruct((1, 1), jnp.float32),
        in_specs=[
            pl.BlockSpec(memory_space=pltpu.MemorySpace.VMEM),
            pl.BlockSpec(memory_space=pltpu.MemorySpace.VMEM),
        ],
        out_specs=pl.BlockSpec(memory_space=pltpu.MemorySpace.SMEM),
    )(x, y)
    return out[0, 0]


# ----------------------------------------------------------------------------
# Large-N path: flash-style column-streaming over the similarity matrix.
# ----------------------------------------------------------------------------
def _mi_loss_tiled_kernel(x_ref, ypos_ref, ycol_ref, out_ref,
                          dot_scr, pos_scr, denom_scr):
    i = pl.program_id(0)                    # row block ("parallel")
    k = pl.program_id(1)                    # column block (reduction axis)
    eps = jnp.float32(_EPS)

    @pl.when(k == 0)
    def _init():
        xf = x_ref[...].astype(jnp.float32)
        yf = ypos_ref[...].astype(jnp.float32)
        d = jnp.sum(xf * yf, axis=1, keepdims=True)
        nx2 = jnp.sum(xf * xf, axis=1, keepdims=True)
        ny2 = jnp.sum(yf * yf, axis=1, keepdims=True)
        dot_scr[...] = d
        pos_scr[...] = d / jnp.maximum(jnp.sqrt(nx2) * jnp.sqrt(ny2), eps)
        denom_scr[...] = jnp.zeros_like(denom_scr)

    # [T, T] block of x @ y.T (contract over features; no transposed copy)
    s = jax.lax.dot_general(
        x_ref[...], ycol_ref[...],
        dimension_numbers=(((1,), (1,)), ((), ())),
        preferred_element_type=jnp.float32)

    partial = jnp.sum(jnp.exp(s), axis=1, keepdims=True)          # [T, 1]
    # With square tiles only the (i == k) block contains diagonal entries;
    # there, replace exp(diag) = exp(dot_xy) with exp(0) = 1.
    corr = jnp.where(i == k, 1.0 - jnp.exp(dot_scr[...]),
                     jnp.zeros_like(dot_scr))
    denom_scr[...] += partial + corr

    @pl.when(k == pl.num_programs(1) - 1)
    def _finish():
        out_ref[...] = jnp.log(denom_scr[...] + eps) - pos_scr[...]


def _mi_loss_tiled(x, y, tile):
    n, d = x.shape
    num_blocks = n // tile
    per_row = pl.pallas_call(
        _mi_loss_tiled_kernel,
        out_shape=jax.ShapeDtypeStruct((n, 1), jnp.float32),
        grid_spec=pltpu.PrefetchScalarGridSpec(
            num_scalar_prefetch=0,
            grid=(num_blocks, num_blocks),
            in_specs=[
                pl.BlockSpec((tile, d), lambda i, k: (i, 0)),   # x row block
                pl.BlockSpec((tile, d), lambda i, k: (i, 0)),   # y row block (pos_sim)
                pl.BlockSpec((tile, d), lambda i, k: (k, 0)),   # y col block (neg term)
            ],
            out_specs=pl.BlockSpec((tile, 1), lambda i, k: (i, 0)),
            scratch_shapes=[
                pltpu.VMEM((tile, 1), jnp.float32),   # dot(x_i, y_i)
                pltpu.VMEM((tile, 1), jnp.float32),   # cosine pos_sim
                pltpu.VMEM((tile, 1), jnp.float32),   # running exp row-sum
            ],
        ),
        compiler_params=pltpu.CompilerParams(
            dimension_semantics=("parallel", "arbitrary")),
    )(x, y, y)
    return jnp.mean(per_row)


def mutual_information_loss(x, y, *, tile=128):
    """x, y: [N, D] arrays. Returns the scalar float32 loss of the PyTorch
    MutualInformationLoss forward."""
    assert x.shape == y.shape and x.ndim == 2
    n, _ = x.shape
    if n >= 2 * tile and n % tile == 0:
        return _mi_loss_tiled(x, y, tile)
    # TODO(synk): pad N to a tile multiple (with zero rows excluded from the
    # mean) so arbitrary large N can route through the tiled path too.
    return _mi_loss_small(x, y)


# ----------------------------------------------------------------------------
# Pure-JAX reference mirroring the PyTorch module exactly.
# ----------------------------------------------------------------------------
def _reference(x, y):
    eps = 1e-8
    x = x.astype(jnp.float32)
    y = y.astype(jnp.float32)
    pos_sim = jnp.sum(x * y, axis=1) / jnp.maximum(
        jnp.linalg.norm(x, axis=1) * jnp.linalg.norm(y, axis=1), eps)
    sim = x @ y.T
    neg_mask = 1.0 - jnp.eye(sim.shape[0], dtype=jnp.float32)
    neg_sim = sim * neg_mask
    loss = -jnp.log(jnp.exp(pos_sim) / (jnp.sum(jnp.exp(neg_sim), axis=1) + 1e-8))
    return jnp.mean(loss)


if __name__ == "__main__":
    key = jax.random.PRNGKey(0)
    kx, ky, kx2, ky2 = jax.random.split(key, 4)

    # Tolerance accounts for MXU multi-pass f32 vs XLA matmul rounding and the
    # analytic diagonal correction; results agree far tighter in practice.
    RTOL, ATOL = 1e-4, 1e-5

    # --- small path: N=8 embeddings, feature dim 128 on the lane axis ---
    N, D = 8, 128
    x = jax.random.normal(kx, (N, D), dtype=jnp.float32) * 0.1
    y = jax.random.normal(ky, (N, D), dtype=jnp.float32) * 0.1
    loss_small = mutual_information_loss(x, y)
    jax.block_until_ready(loss_small)
    ref_small = _reference(x, y)
    assert jnp.allclose(loss_small, ref_small, rtol=RTOL, atol=ATOL), (
        loss_small, ref_small)

    # --- tiled path: N=256 rows, two 128-row blocks per axis ---
    N2, D2 = 256, 128
    x2 = jax.random.normal(kx2, (N2, D2), dtype=jnp.float32) * 0.05
    y2 = jax.random.normal(ky2, (N2, D2), dtype=jnp.float32) * 0.05
    loss_tiled = mutual_information_loss(x2, y2, tile=128)
    jax.block_until_ready(loss_tiled)
    ref_tiled = _reference(x2, y2)
    assert jnp.allclose(loss_tiled, ref_tiled, rtol=RTOL, atol=ATOL), (
        loss_tiled, ref_tiled)

    print("KERNEL_OK")
</pallas_src>

<mosaic_0001>
module attributes {stable_mosaic.version = 11 : i64} {
  func.func @_mi_loss_small_kernel(%arg0: memref<8x128xf32, #tpu.memory_space<vmem>>, %arg1: memref<8x128xf32, #tpu.memory_space<vmem>>, %arg2: memref<1x1xf32, #tpu.memory_space<smem>>) attributes {dimension_semantics = [], scalar_prefetch = 0 : i64, scratch_operands = 0 : i64, tpu.core_type = #tpu.core_type<tc>} {
    %c0 = arith.constant 0 : index
    %c0_0 = arith.constant 0 : index
    %0 = vector.load %arg0[%c0, %c0_0] : memref<8x128xf32, #tpu.memory_space<vmem>>, vector<8x128xf32>
    %c0_1 = arith.constant 0 : index
    %c0_2 = arith.constant 0 : index
    %1 = vector.load %arg1[%c0_1, %c0_2] : memref<8x128xf32, #tpu.memory_space<vmem>>, vector<8x128xf32>
    %2 = arith.mulf %0, %1 : vector<8x128xf32>
    %cst = arith.constant dense<0.000000e+00> : vector<8xf32>
    %3 = vector.multi_reduction <add>, %2, %cst [1] : vector<8x128xf32> to vector<8xf32>
    %4 = vector.shape_cast %3 : vector<8xf32> to vector<8x1xf32>
    %5 = arith.mulf %0, %0 : vector<8x128xf32>
    %cst_3 = arith.constant dense<0.000000e+00> : vector<8xf32>
    %6 = vector.multi_reduction <add>, %5, %cst_3 [1] : vector<8x128xf32> to vector<8xf32>
    %7 = vector.shape_cast %6 : vector<8xf32> to vector<8x1xf32>
    %8 = arith.mulf %1, %1 : vector<8x128xf32>
    %cst_4 = arith.constant dense<0.000000e+00> : vector<8xf32>
    %9 = vector.multi_reduction <add>, %8, %cst_4 [1] : vector<8x128xf32> to vector<8xf32>
    %10 = vector.shape_cast %9 : vector<8xf32> to vector<8x1xf32>
    %11 = math.sqrt %7 : vector<8x1xf32>
    %12 = math.sqrt %10 : vector<8x1xf32>
    %13 = arith.mulf %11, %12 : vector<8x1xf32>
    %cst_5 = arith.constant 9.99999993E-9 : f32
    %14 = vector.broadcast %cst_5 : f32 to vector<8x1xf32>
    %15 = arith.maximumf %13, %14 : vector<8x1xf32>
    %16 = arith.divf %4, %15 : vector<8x1xf32>
    %cst_6 = arith.constant dense<0.000000e+00> : vector<8x8xf32>
    %17 = tpu.matmul %0, %1, %cst_6 {dimension_numbers = #tpu.dot_dimension_numbers<[1], [1], [0], [0], [0, 0, 1, 0], [], []>} : vector<8x128xf32>, vector<8x128xf32>, vector<8x8xf32> -> vector<8x8xf32>
    %18 = math.exp %17 : vector<8x8xf32>
    %cst_7 = arith.constant dense<0.000000e+00> : vector<8xf32>
    %19 = vector.multi_reduction <add>, %18, %cst_7 [1] : vector<8x8xf32> to vector<8xf32>
    %20 = vector.shape_cast %19 : vector<8xf32> to vector<8x1xf32>
    %21 = math.exp %4 : vector<8x1xf32>
    %22 = arith.subf %20, %21 : vector<8x1xf32>
    %cst_8 = arith.constant 1.000000e+00 : f32
    %23 = vector.broadcast %cst_8 : f32 to vector<8x1xf32>
    %24 = arith.addf %22, %23 : vector<8x1xf32>
    %cst_9 = arith.constant 9.99999993E-9 : f32
    %25 = vector.broadcast %cst_9 : f32 to vector<8x1xf32>
    %26 = arith.addf %24, %25 : vector<8x1xf32>
    %27 = math.log %26 : vector<8x1xf32>
    %28 = arith.subf %27, %16 : vector<8x1xf32>
    %29 = vector.shape_cast %28 : vector<8x1xf32> to vector<1x8x1xf32>
    %cst_10 = arith.constant dense<0.000000e+00> : vector<1xf32>
    %30 = vector.multi_reduction <add>, %29, %cst_10 [1, 2] : vector<1x8x1xf32> to vector<1xf32>
    %31 = vector.shape_cast %30 : vector<1xf32> to vector<1x1x1xf32>
    %32 = vector.extract %31[0, 0, 0] : f32 from vector<1x1x1xf32>
    %cst_11 = arith.constant 8.000000e+00 : f32
    %33 = arith.divf %32, %cst_11 : f32
    %c0_12 = arith.constant 0 : index
    %c0_13 = arith.constant 0 : index
    %34 = memref.load %arg2[%c0_12, %c0_13] : memref<1x1xf32, #tpu.memory_space<smem>>
    memref.store %33, %arg2[%c0_12, %c0_13] : memref<1x1xf32, #tpu.memory_space<smem>>
    return
  }
}

</mosaic_0001>

<llo_original>
// kernel: tpu_custom_call.1
$region0: #{tpu_custom_call.1}
  #allocation0 [shape = 'u32[]', space=smem, size = 0x4, offset = 0x4, fixed_abs, tag = 'smem constant byte address 0x4 - core index']
  #allocation1 [shape = 'u32[72,128]{1,0:T(1,128)}', space=vmem, size = 0x9000, scoped, tag = 'internal scratch']
  %s0 = inlined_call_operand.hbm [shape: f32[8,128], index: 0, kind: input, shape index: {}]
  %s1 = inlined_call_operand.hbm [shape: f32[8,128], index: 1, kind: input, shape index: {}]
  %s2 = inlined_call_operand.hbm [shape: f32[1,1], index: 2, kind: output, shape index: {}]
  %s3 = sld [smem:[#allocation0]]
  $region26: #{tpu_custom_call.1} parent=0
    _
  %s5 = ssub.s32 1, %s3
  %s6 = scalar_select 0, %s5, %s3
  $region1: #{tpu_custom_call.1} parent=0
    #allocation2 [shape = 'u8[4096]{0}', space=vmem, size = 0x1000, scoped, tag = 'input window, operand 0, single buffered']
    #allocation3 [shape = 's32[1]{0}', space=sflag, size = 0x4, scoped, tag = 'scoped memory for tpu_custom_call.1']
    #allocation4 [shape = 's32[1]{0}', space=sflag, size = 0x4, scoped, tag = 'scoped memory for tpu_custom_call.1']
    #allocation5 [shape = 'u8[4096]{0}', space=vmem, size = 0x1000, scoped, tag = 'input window, operand 1, single buffered']
    #allocation6 [shape = 's32[1]{0}', space=sflag, size = 0x4, scoped, tag = 'scoped memory for tpu_custom_call.1']
    #allocation7 [shape = 'u8[512]{0}', space=smem, size = 0x200, scoped, tag = 'output window, operand 0, single buffered']
    %7 = vsyncpa [#allocation3], 0
    %8 = vsyncpa [#allocation6], 0
    %9 = vsyncpa [#allocation4], 0
    // Predicated region
    $region2: #{tpu_custom_call.1} parent=1 // pred_check
      _
    $region3: #{tpu_custom_call.1} parent=1 // pred_check_branch
      %11 = sbr.rel (0) target = $region5
    $region4: #{tpu_custom_call.1} parent=1 // pred_region
      %13 = vsyncadd [#allocation3], 0
      %s15 = sshll.u32 %s0, 4
      %s16 = int_to_ptr.hbm [resolvable:$true] %s15
      %s17 = sshll.u32 [#allocation2], 4
      %s18 = int_to_ptr.vmem [resolvable:$true] %s17
      %20 = dma.hbm_to_vmem [thread:$0]  %s16, 128, %s18, [#allocation3]
    $region5: #{tpu_custom_call.1} parent=1 // pred_fallthru
      _
    // Predicated region
    $region6: #{tpu_custom_call.1} parent=1 // pred_check
      _
    $region7: #{tpu_custom_call.1} parent=1 // pred_check_branch
      %22 = sbr.rel (0) target = $region9
    $region8: #{tpu_custom_call.1} parent=1 // pred_region
      %24 = vsyncadd [#allocation6], 0
      %s26 = sshll.u32 %s1, 4
      %s27 = int_to_ptr.hbm [resolvable:$true] %s26
      %s28 = sshll.u32 [#allocation5], 4
      %s29 = int_to_ptr.vmem [resolvable:$true] %s28
      %31 = dma.hbm_to_vmem [thread:$0]  %s27, 128, %s29, [#allocation6]
    $region9: #{tpu_custom_call.1} parent=1 // pred_fallthru
      _
    // Predicated region
    $region10: #{tpu_custom_call.1} parent=1 // pred_check
      _
    $region11: #{tpu_custom_call.1} parent=1 // pred_check_branch
      %33 = sbr.rel (0) target = $region13
    $region12: #{tpu_custom_call.1} parent=1 // pred_region
      %35 = dma.done [#allocation3], 128
    $region13: #{tpu_custom_call.1} parent=1 // pred_fallthru
      _
    // Predicated region
    $region14: #{tpu_custom_call.1} parent=1 // pred_check
      _
    $region15: #{tpu_custom_call.1} parent=1 // pred_check_branch
      %37 = sbr.rel (0) target = $region17
    $region16: #{tpu_custom_call.1} parent=1 // pred_region
      %39 = dma.done [#allocation6], 128
    $region17: #{tpu_custom_call.1} parent=1 // pred_fallthru
      _
    %v40 = vld [vmem:[#allocation2] sm:$0xff]
    %v41 = vld [vmem:[#allocation5] sm:$0xff]
    %v42 = vmul.f32 %v40, %v41
    %43 = vadd.xlane.f32.xlu0 %v42
    %v44 = vpop.xlane.xlu0 %43
    %v45 = vmul.f32 %v40, %v40
    %46 = vadd.xlane.f32.xlu0 %v45
    %v47 = vpop.xlane.xlu0 %46
    %v48 = vmul.f32 %v41, %v41
    %49 = vadd.xlane.f32.xlu0 %v48
    %v50 = vpop.xlane.xlu0 %49
    %v51 = vrsqrt.pop %v47
    %v52 = vmul.f32 %v51, %v47
    %v53 = vmul.f32 %v52, %v51
    %v54 = vmul.f32 0.5, %v53
    %v55 = vsub.f32 1.5, %v54
    %v56 = vmul.f32 %v51, %v55
    %v57 = vmul.f32 %v47, %v56
    %vm58 = vcmp.eq.f32.partialorder %v47, inf
    %v59 = vsel %vm58, %v47, %v57
    %vm60 = vcmp.eq.f32.partialorder %v47, 0.0
    %v61 = vand.u32 %v47, 2147483648
    %v62 = vsel %vm60, %v61, %v59
    %v63 = vrsqrt.pop %v50
    %v64 = vmul.f32 %v63, %v50
    %v65 = vmul.f32 %v64, %v63
    %v66 = vmul.f32 0.5, %v65
    %v67 = vsub.f32 1.5, %v66
    %v68 = vmul.f32 %v63, %v67
    %v69 = vmul.f32 %v50, %v68
    %vm70 = vcmp.eq.f32.partialorder %v50, inf
    %v71 = vsel %vm70, %v50, %v69
    %vm72 = vcmp.eq.f32.partialorder %v50, 0.0
    %v73 = vand.u32 %v50, 2147483648
    %v74 = vsel %vm72, %v73, %v71
    %v75 = vmul.f32 %v62, %v74
    %v76 = vmax.f32 %v75, 1e-08
    %v77 = vrcp.pop %v76
    %v78 = vmul.f32 %v76, %v77
    %v79 = vsub.f32 1.0, %v78
    %v80 = vmul.f32 %v77, %v79
    %v81 = vadd.f32 %v77, %v80
    %vm82 = vweird.f32 %v76
    %vm83 = vweird.f32 %v77
    %vm84 = vmor %vm82, %vm83
    %v85 = vsel %vm84, %v77, %v81
    %v86 = vand.u32 2147483647, %v76
    %vm87 = vcmp.eq.f32.partialorder %v86, 8.507059e+37
    %v88 = vand.u32 %v76, 2147483648
    %v89 = vor.u32 1.1754944e-38, %v88
    %v90 = vsel %vm87, %v89, %v85
    %v91 = vmul.f32 %v44, %v90
    %92 = vmatpush.xpose.msra.mxu0 0.0
    %93 = vmatpush.xpose.msra.mxu0 0.0
    %94 = vmatpush.xpose.msra.mxu0 0.0
    %95 = vmatpush.xpose.msra.mxu0 0.0
    %96 = vmatpush.xpose.msra.mxu0 0.0
    %97 = vmatpush.xpose.msra.mxu0 0.0
    %98 = vmatpush.xpose.msra.mxu0 0.0
    %99 = vmatpush.xpose.msra.mxu0 0.0
    %100 = vmatpush.xpose.msra.mxu0 0.0
    %101 = vmatpush.xpose.msra.mxu0 0.0
    %102 = vmatpush.xpose.msra.mxu0 0.0
    %103 = vmatpush.xpose.msra.mxu0 0.0
    %104 = vmatpush.xpose.msra.mxu0 0.0
    %105 = vmatpush.xpose.msra.mxu0 0.0
    %106 = vmatpush.xpose.msra.mxu0 0.0
    %107 = vmatpush.xpose.msra.mxu0 %v41
    %108 = vmatmul.f32.gmra.mxu0 %v40
    %v109 = vpop.f32.mrf.mxu0
    %v110 = vadd.f32 0.0, %v109
    %111 = vdwg.mxu0
    %v112 = vmul.f32 %v110, 1.442695
    %v113 = vpow.pop %v112
    %vm114 = vcmask 64512
    %v115 = vsel %vm114, %v113, 0.0
    %116 = vadd.xlane.f32.xlu0 %v115
    %v117 = vpop.xlane.xlu0 %116
    %v118 = vmul.f32 %v44, 1.442695
    %v119 = vpow.pop %v118
    %v120 = vsub.f32 %v117, %v119
    %v121 = vadd.f32 %v120, 1.0
    %v122 = vadd.f32 %v121, 1e-08
    %v123 = vlog2.pop %v122
    %v124 = vmul.f32 %v123, 0.6931472
    %v125 = vsub.f32 %v124, %v91
    %vm126 = vcmask 7168
    %v127 = vsel %vm126, %v125, 0.0
    %128 = vadd.xlane.f32.xlu0 %v127
    %v129 = vpop.xlane.xlu0 %128
    %v130 = vrot.slane %v129, 4
    %v131 = vadd.f32 %v129, %v130
    %v132 = vrot.slane %v131, 2
    %v133 = vadd.f32 %v131, %v132
    %v134 = vrot.slane %v133, 1
    %v135 = vadd.f32 %v133, %v134
    %s136 = vtos %v135
    %v137 = vrcp.pop 8.0
    %v138 = vmul.f32 8.0, %v137
    %v139 = vsub.f32 1.0, %v138
    %v140 = vmul.f32 %v137, %v139
    %v141 = vadd.f32 %v137, %v140
    %vm142 = vweird.f32 %v137
    %v143 = vsel %vm142, %v137, %v141
    %s144 = vtos %v143
    %s145 = smul.f32 %s136, %s144
    %s146 = scalar_lea.smem [#allocation7], 0
    %147 = sst [smem:[%s146]] %s145
    // Predicated region
    $region18: #{tpu_custom_call.1} parent=1 // pred_check
      _
    $region19: #{tpu_custom_call.1} parent=1 // pred_check_branch
      %149 = sbr.rel (0) target = $region21
    $region20: #{tpu_custom_call.1} parent=1 // pred_region
      %151 = vsyncadd [#allocation4], 0
      %s153 = sshll.u32 %s2, 4
      %s154 = int_to_ptr.hbm [resolvable:$true] %s153
      %156 = dma.smem_to_hbm [#allocation7], 16, %s154, [#allocation4]
    $region21: #{tpu_custom_call.1} parent=1 // pred_fallthru
      _
    // Predicated region
    $region22: #{tpu_custom_call.1} parent=1 // pred_check
      _
    $region23: #{tpu_custom_call.1} parent=1 // pred_check_branch
      %158 = sbr.rel (0) target = $region25
    $region24: #{tpu_custom_call.1} parent=1 // pred_region
      %160 = dma.done [#allocation4], 16
    $region25: #{tpu_custom_call.1} parent=1 // pred_fallthru
      _
    %161 = sfence
    %162 = vsyncpa [#allocation3], 1
    %163 = vsyncpa [#allocation6], 1
    %164 = vsyncpa [#allocation4], 1

</llo_original>
